<compile_context>
chip_gen: v6e
topology: v6e:2x2x1
jax: 0.10.0
libtpu: 0.0.40
codegen_flags: <defaults>
</compile_context>

<pallas_src>
import functools

import jax
import jax.numpy as jnp
from jax import lax
from jax.experimental import pallas as pl
from jax.experimental.pallas import tpu as pltpu

LOGICAL_FORM = "logical_form"
PREDICATE_POINTER = "predicate_pointer"
TYPE_POINTER = "type_pointer"
ENTITY_POINTER = "entity_pointer"
MULTITASK = "multitask"

IGNORE_INDEX = 0  # pad index, same role as PyTorch's ignore_index

# Conservative per-call VMEM budget: fits v5e's 16 MiB scoped default and the
# 32 MiB scoped default of v6e/v7x (v7x has only 64 MiB physical per TC).
_VMEM_BUDGET_BYTES = 12 * 1024 * 1024


def _round_up(x, m):
    return ((x + m - 1) // m) * m


def _num_tensorcores():
    """Best-effort TensorCore count of the default device (2 on v7x/megacore)."""
    try:
        return max(1, int(getattr(jax.devices()[0], "num_cores", 1) or 1))
    except Exception:
        return 1


def _vmem_estimate(tile_n, class_sizes, logit_itemsizes):
    """Rough VMEM bytes for one grid step (double-buffered inputs + temps)."""
    est = 0
    for c, ib in zip(class_sizes, logit_itemsizes):
        c_pad = _round_up(c, 128)
        est += 2 * tile_n * c_pad * ib   # double-buffered logits input block
        est += 2 * tile_n * c_pad * 4    # f32 cast + exp working tiles (worst case)
        est += 2 * tile_n * 128 * 4      # lane-padded (tile_n, 1) int32 targets
    est += 2 * 8 * 128 * 4               # resident per-split scalar-partials block
    return est


def _fused_ce_kernel(l0, t0, l1, t1, l2, t2, l3, t3, acc_ref,
                     *, tiles_per_split, n_tiles, ignore_index):
    """One grid step: masked NLL scalar partials for all 4 tasks on one tile.

    acc_ref is a tiny resident (1, 8, 128) f32 block; row 2*t holds the loss
    sum of task t (replicated across lanes), row 2*t+1 the valid count.
    """
    p = pl.program_id(0)   # "parallel" split (2nd TensorCore on v7x)
    i = pl.program_id(1)   # "arbitrary" sweep over row tiles
    blk = p * tiles_per_split + i

    @pl.when(i == 0)
    def _init():
        acc_ref[...] = jnp.zeros_like(acc_ref)

    # Duplicated (clamped) tiles on a ragged split do no compute at all.
    @pl.when(blk < n_tiles)
    def _compute():
        ins = ((l0, t0), (l1, t1), (l2, t2), (l3, t3))
        for t, (l_ref, t_ref) in enumerate(ins):
            logits = l_ref[...].astype(jnp.float32)            # (tile_n, C) f32
            tgt = t_ref[...]                                   # (tile_n, 1) int32

            # Stable logsumexp; `shifted` feeds exp only (no second full-tile
            # read), the target logit is gathered from the raw logits.
            m = jnp.max(logits, axis=-1, keepdims=True)
            sumexp = jnp.sum(jnp.exp(logits - m), axis=-1, keepdims=True)
            lse = jnp.log(sumexp) + m

            col = lax.broadcasted_iota(jnp.int32, logits.shape, 1)
            t_logit = jnp.sum(jnp.where(col == tgt, logits, 0.0),
                              axis=-1, keepdims=True)
            nll = lse - t_logit                                # (tile_n, 1)

            # TODO(synk): targets outside [0, C) that are != ignore_index are
            # undefined behaviour (PyTorch raises); they contribute lse here.
            # Padded tail rows carry tgt == ignore_index -> fully masked.
            valid = tgt != ignore_index                        # (tile_n, 1)
            tile_loss = jnp.sum(jnp.where(valid, nll, 0.0))    # scalar (select!)
            tile_cnt = jnp.sum(jnp.where(valid, 1.0, 0.0))     # scalar

            acc_ref[0, 2 * t, :] += tile_loss                  # 1-vreg row RMW
            acc_ref[0, 2 * t + 1, :] += tile_cnt


def multitask_cross_entropy(logits_list, targets_list, *,
                            ignore_index=IGNORE_INDEX, max_tile_n=512,
                            n_splits=None):
    """Per-task mean cross-entropy (ignore_index masked) for 4 tasks, fused
    into a single Pallas launch.  Returns a (4,) float32 vector.

    A task whose targets are all ignore_index yields NaN (0/0), matching
    PyTorch's mean-reduction semantics.
    """
    assert len(logits_list) == 4 and len(targets_list) == 4
    n = logits_list[0].shape[0]
    # The source model shares one flattened (batch*seq) axis across all heads.
    for l, t in zip(logits_list, targets_list):
        assert l.shape[0] == n and t.shape[0] == n

    class_sizes = [int(l.shape[1]) for l in logits_list]
    itemsizes = [jnp.dtype(l.dtype).itemsize for l in logits_list]

    # tile_n: as large as the VMEM budget allows (>=512 already reaches ~85%
    # of HBM roofline), clamped to the 8-rounded problem size.
    tile_n = max(8, _round_up(min(int(max_tile_n), _round_up(n, 8)), 8))
    while tile_n > 8 and _vmem_estimate(tile_n, class_sizes, itemsizes) > _VMEM_BUDGET_BYTES:
        tile_n = max(8, _round_up(tile_n // 2, 8))

    n_tiles = pl.cdiv(n, tile_n)
    if n_splits is None:
        # Only split when the device actually has >=2 TensorCores (v7x).
        n_splits = 2 if (_num_tensorcores() >= 2 and n_tiles >= 2) else 1
    n_splits = max(1, min(int(n_splits), n_tiles))
    tiles_per_split = pl.cdiv(n_tiles, n_splits)

    def _in_map(p, i):
        # Clamp so a ragged split never DMAs fully out of bounds; the clamped
        # duplicate tile skips all compute via pl.when in the kernel.
        return (jnp.minimum(p * tiles_per_split + i, n_tiles - 1), 0)

    n_rows_pad = n_tiles * tile_n
    in_specs, args = [], []
    for logits, targets in zip(logits_list, targets_list):
        c = logits.shape[1]
        in_specs.append(pl.BlockSpec((tile_n, c), _in_map))
        in_specs.append(pl.BlockSpec((tile_n, 1), _in_map))
        # Logits stay in their native dtype (bf16 producers halve DMA bytes);
        # the f32 cast happens inside the kernel only.
        args.append(logits)
        # Targets are tiny: pad with ignore_index so tail rows self-mask.
        tgt = targets.reshape(-1).astype(jnp.int32)
        if n_rows_pad > n:
            tgt = jnp.pad(tgt, (0, n_rows_pad - n), constant_values=ignore_index)
        args.append(tgt.reshape(n_rows_pad, 1))

    out_spec = pl.BlockSpec((1, 8, 128), lambda p, i: (p, 0, 0))
    out_shape = jax.ShapeDtypeStruct((n_splits, 8, 128), jnp.float32)

    vmem_est = _vmem_estimate(tile_n, class_sizes, itemsizes)
    vmem_limit = int(min(max(vmem_est * 3 // 2 + (4 << 20), 16 << 20), 32 << 20))

    kernel = functools.partial(
        _fused_ce_kernel, tiles_per_split=tiles_per_split,
        n_tiles=n_tiles, ignore_index=ignore_index)

    out = pl.pallas_call(
        kernel,
        out_shape=out_shape,
        grid_spec=pltpu.PrefetchScalarGridSpec(
            num_scalar_prefetch=0,
            grid=(n_splits, tiles_per_split),
            in_specs=in_specs,
            out_specs=out_spec,
        ),
        compiler_params=pltpu.CompilerParams(
            dimension_semantics=("parallel", "arbitrary"),
            vmem_limit_bytes=vmem_limit),
    )(*args)

    # Tiny final reduction (n_splits scalars per partial) in plain JAX.
    losses = []
    for t in range(4):
        loss_sum = jnp.sum(out[:, 2 * t, 0])
        valid_cnt = jnp.sum(out[:, 2 * t + 1, 0])
        losses.append(loss_sum / valid_cnt)
    return jnp.stack(losses).astype(jnp.float32)


class MultiTaskLossPallas:
    """JAX/Pallas port of MultiTaskLoss (uncertainty-weighted 4-task CE)."""

    def __init__(self, ignore_index=IGNORE_INDEX):
        self.ignore_index = ignore_index
        # deterministic parameter init, identical to torch.zeros(4)
        self.log_vars = jnp.zeros((4,), jnp.float32)
        self.mml_emp = jnp.array([1.0, 1.0, 1.0, 1.0], jnp.float32)  # True -> 1

    def __call__(self, output, target, task=MULTITASK):
        keys = (LOGICAL_FORM, PREDICATE_POINTER, TYPE_POINTER, ENTITY_POINTER)
        task_losses = multitask_cross_entropy(
            [output[k] for k in keys],
            [target[k] for k in keys],
            ignore_index=self.ignore_index)               # (4,)
        dtype = task_losses.dtype
        # tiny 4-element weighting stays in plain JAX glue (not a hot path)
        stds = jnp.exp(self.log_vars.astype(dtype)) ** 0.5
        weights = 1.0 / ((self.mml_emp.astype(dtype) + 1.0) * stds ** 2)
        losses = weights * task_losses + jnp.log(stds)
        result = {
            LOGICAL_FORM: losses[0],
            PREDICATE_POINTER: losses[1],
            TYPE_POINTER: losses[2],
            ENTITY_POINTER: losses[3],
            MULTITASK: losses.mean(),
        }
        # the original module returns result[args.task]; default to MULTITASK
        return result[task]


if __name__ == "__main__":
    key = jax.random.PRNGKey(0)
    batch, seq = 2, 8
    n = batch * seq                                  # 16 flattened examples / task
    vocab = {LOGICAL_FORM: 32, PREDICATE_POINTER: 24,
             TYPE_POINTER: 40, ENTITY_POINTER: 48}

    output, target = {}, {}
    for idx, (name, c) in enumerate(vocab.items()):
        k_logit, k_tgt = jax.random.split(jax.random.fold_in(key, idx))
        output[name] = jax.random.normal(k_logit, (n, c), jnp.float32)
        # targets in [0, C); index 0 == ignore_index occurs naturally, is masked
        target[name] = jax.random.randint(k_tgt, (n,), 0, c, jnp.int32)

    loss_mod = MultiTaskLossPallas(ignore_index=IGNORE_INDEX)
    loss = loss_mod(output, target, task=MULTITASK)
    jax.block_until_ready(loss)
    assert loss.shape == () and jnp.isfinite(loss)
    print("KERNEL_OK")
</pallas_src>

<mosaic_0001>
module attributes {stable_mosaic.version = 11 : i64} {
  func.func @_fused_ce_kernel(%arg0: i32, %arg1: i32, %arg2: memref<16x32xf32, #tpu.memory_space<vmem>>, %arg3: memref<16x1xi32, #tpu.memory_space<vmem>>, %arg4: memref<16x24xf32, #tpu.memory_space<vmem>>, %arg5: memref<16x1xi32, #tpu.memory_space<vmem>>, %arg6: memref<16x40xf32, #tpu.memory_space<vmem>>, %arg7: memref<16x1xi32, #tpu.memory_space<vmem>>, %arg8: memref<16x48xf32, #tpu.memory_space<vmem>>, %arg9: memref<16x1xi32, #tpu.memory_space<vmem>>, %arg10: memref<1x8x128xf32, #tpu.memory_space<vmem>>) attributes {dimension_semantics = [#tpu.dimension_semantics<parallel>, #tpu.dimension_semantics<arbitrary>], iteration_bounds = array<i64: 1, 1>, scalar_prefetch = 0 : i64, scratch_operands = 0 : i64, tpu.core_type = #tpu.core_type<tc>, window_params = [{transform_indices = @transform_0, window_bounds = array<i64: 16, 32>}, {transform_indices = @transform_1, window_bounds = array<i64: 16, 1>}, {transform_indices = @transform_2, window_bounds = array<i64: 16, 24>}, {transform_indices = @transform_3, window_bounds = array<i64: 16, 1>}, {transform_indices = @transform_4, window_bounds = array<i64: 16, 40>}, {transform_indices = @transform_5, window_bounds = array<i64: 16, 1>}, {transform_indices = @transform_6, window_bounds = array<i64: 16, 48>}, {transform_indices = @transform_7, window_bounds = array<i64: 16, 1>}, {transform_indices = @transform_8, window_bounds = array<i64: 1, 8, 128>}]} {
    %c1_i32 = arith.constant 1 : i32
    %0 = arith.muli %arg0, %c1_i32 : i32
    %1 = arith.addi %0, %arg1 : i32
    %c0_i32 = arith.constant 0 : i32
    %2 = arith.cmpi eq, %arg1, %c0_i32 : i32
    %3 = arith.extui %2 : i1 to i32
    %c0_i32_0 = arith.constant 0 : i32
    %4 = arith.cmpi ne, %3, %c0_i32_0 : i32
    scf.if %4 {
      %cst = arith.constant 0.000000e+00 : f32
      %8 = vector.broadcast %cst : f32 to vector<1x8x128xf32>
      %c0 = arith.constant 0 : index
      %c0_3 = arith.constant 0 : index
      %c0_4 = arith.constant 0 : index
      %9 = vector.load %arg10[%c0, %c0_3, %c0_4] : memref<1x8x128xf32, #tpu.memory_space<vmem>>, vector<1x8x128xf32>
      tpu.vector_store %arg10[%c0, %c0_3, %c0_4], %8 {strides = array<i32>} : memref<1x8x128xf32, #tpu.memory_space<vmem>>, vector<1x8x128xf32>,
    } else {
    }
    %c1_i32_1 = arith.constant 1 : i32
    %5 = arith.cmpi slt, %1, %c1_i32_1 : i32
    %6 = arith.extui %5 : i1 to i32
    %c0_i32_2 = arith.constant 0 : i32
    %7 = arith.cmpi ne, %6, %c0_i32_2 : i32
    scf.if %7 {
      %c0 = arith.constant 0 : index
      %c0_3 = arith.constant 0 : index
      %8 = vector.load %arg2[%c0, %c0_3] : memref<16x32xf32, #tpu.memory_space<vmem>>, vector<16x32xf32>
      %c0_4 = arith.constant 0 : index
      %c0_5 = arith.constant 0 : index
      %9 = vector.load %arg3[%c0_4, %c0_5] : memref<16x1xi32, #tpu.memory_space<vmem>>, vector<16x1xi32>
      %cst = arith.constant dense<0xFF800000> : vector<16xf32>
      %10 = vector.multi_reduction <maximumf>, %8, %cst [1] : vector<16x32xf32> to vector<16xf32>
      %11 = vector.shape_cast %10 : vector<16xf32> to vector<16x1xf32>
      %12 = vector.broadcast %11 : vector<16x1xf32> to vector<16x32xf32>
      %13 = arith.subf %8, %12 : vector<16x32xf32>
      %14 = math.exp %13 : vector<16x32xf32>
      %cst_6 = arith.constant dense<0.000000e+00> : vector<16xf32>
      %15 = vector.multi_reduction <add>, %14, %cst_6 [1] : vector<16x32xf32> to vector<16xf32>
      %16 = vector.shape_cast %15 : vector<16xf32> to vector<16x1xf32>
      %17 = math.log %16 : vector<16x1xf32>
      %18 = arith.addf %17, %11 : vector<16x1xf32>
      %19 = tpu.iota {dimensions = array<i32: 1>} : vector<16x32xi32>
      %20 = vector.broadcast %9 : vector<16x1xi32> to vector<16x32xi32>
      %21 = arith.cmpi eq, %19, %20 : vector<16x32xi32>
      %cst_7 = arith.constant 0.000000e+00 : f32
      %22 = vector.broadcast %cst_7 : f32 to vector<16x32xf32>
      %23 = arith.select %21, %8, %22 : vector<16x32xi1>, vector<16x32xf32>
      %cst_8 = arith.constant dense<0.000000e+00> : vector<16xf32>
      %24 = vector.multi_reduction <add>, %23, %cst_8 [1] : vector<16x32xf32> to vector<16xf32>
      %25 = vector.shape_cast %24 : vector<16xf32> to vector<16x1xf32>
      %26 = arith.subf %18, %25 : vector<16x1xf32>
      %c0_i32_9 = arith.constant 0 : i32
      %27 = vector.broadcast %c0_i32_9 : i32 to vector<16x1xi32>
      %28 = arith.cmpi ne, %9, %27 : vector<16x1xi32>
      %cst_10 = arith.constant 0.000000e+00 : f32
      %29 = vector.broadcast %cst_10 : f32 to vector<16x1xf32>
      %30 = arith.select %28, %26, %29 : vector<16x1xi1>, vector<16x1xf32>
      %31 = vector.shape_cast %30 : vector<16x1xf32> to vector<1x16x1xf32>
      %cst_11 = arith.constant dense<0.000000e+00> : vector<1xf32>
      %32 = vector.multi_reduction <add>, %31, %cst_11 [1, 2] : vector<1x16x1xf32> to vector<1xf32>
      %33 = vector.shape_cast %32 : vector<1xf32> to vector<1x1x1xf32>
      %34 = vector.extract %33[0, 0, 0] : f32 from vector<1x1x1xf32>
      %cst_12 = arith.constant 1.000000e+00 : f32
      %cst_13 = arith.constant 0.000000e+00 : f32
      %35 = vector.broadcast %cst_12 : f32 to vector<16x1xf32>
      %36 = vector.broadcast %cst_13 : f32 to vector<16x1xf32>
      %37 = arith.select %28, %35, %36 : vector<16x1xi1>, vector<16x1xf32>
      %38 = vector.shape_cast %37 : vector<16x1xf32> to vector<1x16x1xf32>
      %cst_14 = arith.constant dense<0.000000e+00> : vector<1xf32>
      %39 = vector.multi_reduction <add>, %38, %cst_14 [1, 2] : vector<1x16x1xf32> to vector<1xf32>
      %40 = vector.shape_cast %39 : vector<1xf32> to vector<1x1x1xf32>
      %41 = vector.extract %40[0, 0, 0] : f32 from vector<1x1x1xf32>
      %c0_15 = arith.constant 0 : index
      %c0_16 = arith.constant 0 : index
      %c0_17 = arith.constant 0 : index
      %42 = vector.load %arg10[%c0_15, %c0_16, %c0_17] : memref<1x8x128xf32, #tpu.memory_space<vmem>>, vector<1x1x128xf32>
      %43 = vector.shape_cast %42 : vector<1x1x128xf32> to vector<128xf32>
      %44 = vector.broadcast %34 : f32 to vector<128xf32>
      %45 = arith.addf %43, %44 : vector<128xf32>
      %c0_18 = arith.constant 0 : index
      %c0_19 = arith.constant 0 : index
      %c0_20 = arith.constant 0 : index
      %46 = vector.load %arg10[%c0_18, %c0_19, %c0_20] : memref<1x8x128xf32, #tpu.memory_space<vmem>>, vector<1x1x128xf32>
      %47 = vector.shape_cast %46 : vector<1x1x128xf32> to vector<128xf32>
      %48 = vector.shape_cast %45 : vector<128xf32> to vector<1x1x128xf32>
      tpu.vector_store %arg10[%c0_18, %c0_19, %c0_20], %48 {strides = array<i32>} : memref<1x8x128xf32, #tpu.memory_space<vmem>>, vector<1x1x128xf32>,
      %c0_21 = arith.constant 0 : index
      %c1 = arith.constant 1 : index
      %c0_22 = arith.constant 0 : index
      %49 = vector.load %arg10[%c0_21, %c1, %c0_22] : memref<1x8x128xf32, #tpu.memory_space<vmem>>, vector<1x1x128xf32>
      %50 = vector.shape_cast %49 : vector<1x1x128xf32> to vector<128xf32>
      %51 = vector.broadcast %41 : f32 to vector<128xf32>
      %52 = arith.addf %50, %51 : vector<128xf32>
      %c0_23 = arith.constant 0 : index
      %c1_24 = arith.constant 1 : index
      %c0_25 = arith.constant 0 : index
      %53 = vector.load %arg10[%c0_23, %c1_24, %c0_25] : memref<1x8x128xf32, #tpu.memory_space<vmem>>, vector<1x1x128xf32>
      %54 = vector.shape_cast %53 : vector<1x1x128xf32> to vector<128xf32>
      %55 = vector.shape_cast %52 : vector<128xf32> to vector<1x1x128xf32>
      tpu.vector_store %arg10[%c0_23, %c1_24, %c0_25], %55 {strides = array<i32>} : memref<1x8x128xf32, #tpu.memory_space<vmem>>, vector<1x1x128xf32>,
      %c0_26 = arith.constant 0 : index
      %c0_27 = arith.constant 0 : index
      %56 = vector.load %arg4[%c0_26, %c0_27] : memref<16x24xf32, #tpu.memory_space<vmem>>, vector<16x24xf32>
      %c0_28 = arith.constant 0 : index
      %c0_29 = arith.constant 0 : index
      %57 = vector.load %arg5[%c0_28, %c0_29] : memref<16x1xi32, #tpu.memory_space<vmem>>, vector<16x1xi32>
      %cst_30 = arith.constant dense<0xFF800000> : vector<16xf32>
      %58 = vector.multi_reduction <maximumf>, %56, %cst_30 [1] : vector<16x24xf32> to vector<16xf32>
      %59 = vector.shape_cast %58 : vector<16xf32> to vector<16x1xf32>
      %60 = vector.broadcast %59 : vector<16x1xf32> to vector<16x24xf32>
      %61 = arith.subf %56, %60 : vector<16x24xf32>
      %62 = math.exp %61 : vector<16x24xf32>
      %cst_31 = arith.constant dense<0.000000e+00> : vector<16xf32>
      %63 = vector.multi_reduction <add>, %62, %cst_31 [1] : vector<16x24xf32> to vector<16xf32>
      %64 = vector.shape_cast %63 : vector<16xf32> to vector<16x1xf32>
      %65 = math.log %64 : vector<16x1xf32>
      %66 = arith.addf %65, %59 : vector<16x1xf32>
      %67 = tpu.iota {dimensions = array<i32: 1>} : vector<16x24xi32>
      %68 = vector.broadcast %57 : vector<16x1xi32> to vector<16x24xi32>
      %69 = arith.cmpi eq, %67, %68 : vector<16x24xi32>
      %cst_32 = arith.constant 0.000000e+00 : f32
      %70 = vector.broadcast %cst_32 : f32 to vector<16x24xf32>
      %71 = arith.select %69, %56, %70 : vector<16x24xi1>, vector<16x24xf32>
      %cst_33 = arith.constant dense<0.000000e+00> : vector<16xf32>
      %72 = vector.multi_reduction <add>, %71, %cst_33 [1] : vector<16x24xf32> to vector<16xf32>
      %73 = vector.shape_cast %72 : vector<16xf32> to vector<16x1xf32>
      %74 = arith.subf %66, %73 : vector<16x1xf32>
      %c0_i32_34 = arith.constant 0 : i32
      %75 = vector.broadcast %c0_i32_34 : i32 to vector<16x1xi32>
      %76 = arith.cmpi ne, %57, %75 : vector<16x1xi32>
      %cst_35 = arith.constant 0.000000e+00 : f32
      %77 = vector.broadcast %cst_35 : f32 to vector<16x1xf32>
      %78 = arith.select %76, %74, %77 : vector<16x1xi1>, vector<16x1xf32>
      %79 = vector.shape_cast %78 : vector<16x1xf32> to vector<1x16x1xf32>
      %cst_36 = arith.constant dense<0.000000e+00> : vector<1xf32>
      %80 = vector.multi_reduction <add>, %79, %cst_36 [1, 2] : vector<1x16x1xf32> to vector<1xf32>
      %81 = vector.shape_cast %80 : vector<1xf32> to vector<1x1x1xf32>
      %82 = vector.extract %81[0, 0, 0] : f32 from vector<1x1x1xf32>
      %cst_37 = arith.constant 1.000000e+00 : f32
      %cst_38 = arith.constant 0.000000e+00 : f32
      %83 = vector.broadcast %cst_37 : f32 to vector<16x1xf32>
      %84 = vector.broadcast %cst_38 : f32 to vector<16x1xf32>
      %85 = arith.select %76, %83, %84 : vector<16x1xi1>, vector<16x1xf32>
      %86 = vector.shape_cast %85 : vector<16x1xf32> to vector<1x16x1xf32>
      %cst_39 = arith.constant dense<0.000000e+00> : vector<1xf32>
      %87 = vector.multi_reduction <add>, %86, %cst_39 [1, 2] : vector<1x16x1xf32> to vector<1xf32>
      %88 = vector.shape_cast %87 : vector<1xf32> to vector<1x1x1xf32>
      %89 = vector.extract %88[0, 0, 0] : f32 from vector<1x1x1xf32>
      %c0_40 = arith.constant 0 : index
      %c2 = arith.constant 2 : index
      %c0_41 = arith.constant 0 : index
      %90 = vector.load %arg10[%c0_40, %c2, %c0_41] : memref<1x8x128xf32, #tpu.memory_space<vmem>>, vector<1x1x128xf32>
      %91 = vector.shape_cast %90 : vector<1x1x128xf32> to vector<128xf32>
      %92 = vector.broadcast %82 : f32 to vector<128xf32>
      %93 = arith.addf %91, %92 : vector<128xf32>
      %c0_42 = arith.constant 0 : index
      %c2_43 = arith.constant 2 : index
      %c0_44 = arith.constant 0 : index
      %94 = vector.load %arg10[%c0_42, %c2_43, %c0_44] : memref<1x8x128xf32, #tpu.memory_space<vmem>>, vector<1x1x128xf32>
      %95 = vector.shape_cast %94 : vector<1x1x128xf32> to vector<128xf32>
      %96 = vector.shape_cast %93 : vector<128xf32> to vector<1x1x128xf32>
      tpu.vector_store %arg10[%c0_42, %c2_43, %c0_44], %96 {strides = array<i32>} : memref<1x8x128xf32, #tpu.memory_space<vmem>>, vector<1x1x128xf32>,
      %c0_45 = arith.constant 0 : index
      %c3 = arith.constant 3 : index
      %c0_46 = arith.constant 0 : index
      %97 = vector.load %arg10[%c0_45, %c3, %c0_46] : memref<1x8x128xf32, #tpu.memory_space<vmem>>, vector<1x1x128xf32>
      %98 = vector.shape_cast %97 : vector<1x1x128xf32> to vector<128xf32>
      %99 = vector.broadcast %89 : f32 to vector<128xf32>
      %100 = arith.addf %98, %99 : vector<128xf32>
      %c0_47 = arith.constant 0 : index
      %c3_48 = arith.constant 3 : index
      %c0_49 = arith.constant 0 : index
      %101 = vector.load %arg10[%c0_47, %c3_48, %c0_49] : memref<1x8x128xf32, #tpu.memory_space<vmem>>, vector<1x1x128xf32>
      %102 = vector.shape_cast %101 : vector<1x1x128xf32> to vector<128xf32>
      %103 = vector.shape_cast %100 : vector<128xf32> to vector<1x1x128xf32>
      tpu.vector_store %arg10[%c0_47, %c3_48, %c0_49], %103 {strides = array<i32>} : memref<1x8x128xf32, #tpu.memory_space<vmem>>, vector<1x1x128xf32>,
      %c0_50 = arith.constant 0 : index
      %c0_51 = arith.constant 0 : index
      %104 = vector.load %arg6[%c0_50, %c0_51] : memref<16x40xf32, #tpu.memory_space<vmem>>, vector<16x40xf32>
      %c0_52 = arith.constant 0 : index
      %c0_53 = arith.constant 0 : index
      %105 = vector.load %arg7[%c0_52, %c0_53] : memref<16x1xi32, #tpu.memory_space<vmem>>, vector<16x1xi32>
      %cst_54 = arith.constant dense<0xFF800000> : vector<16xf32>
      %106 = vector.multi_reduction <maximumf>, %104, %cst_54 [1] : vector<16x40xf32> to vector<16xf32>
      %107 = vector.shape_cast %106 : vector<16xf32> to vector<16x1xf32>
      %108 = vector.broadcast %107 : vector<16x1xf32> to vector<16x40xf32>
      %109 = arith.subf %104, %108 : vector<16x40xf32>
      %110 = math.exp %109 : vector<16x40xf32>
      %cst_55 = arith.constant dense<0.000000e+00> : vector<16xf32>
      %111 = vector.multi_reduction <add>, %110, %cst_55 [1] : vector<16x40xf32> to vector<16xf32>
      %112 = vector.shape_cast %111 : vector<16xf32> to vector<16x1xf32>
      %113 = math.log %112 : vector<16x1xf32>
      %114 = arith.addf %113, %107 : vector<16x1xf32>
      %115 = tpu.iota {dimensions = array<i32: 1>} : vector<16x40xi32>
      %116 = vector.broadcast %105 : vector<16x1xi32> to vector<16x40xi32>
      %117 = arith.cmpi eq, %115, %116 : vector<16x40xi32>
      %cst_56 = arith.constant 0.000000e+00 : f32
      %118 = vector.broadcast %cst_56 : f32 to vector<16x40xf32>
      %119 = arith.select %117, %104, %118 : vector<16x40xi1>, vector<16x40xf32>
      %cst_57 = arith.constant dense<0.000000e+00> : vector<16xf32>
      %120 = vector.multi_reduction <add>, %119, %cst_57 [1] : vector<16x40xf32> to vector<16xf32>
      %121 = vector.shape_cast %120 : vector<16xf32> to vector<16x1xf32>
      %122 = arith.subf %114, %121 : vector<16x1xf32>
      %c0_i32_58 = arith.constant 0 : i32
      %123 = vector.broadcast %c0_i32_58 : i32 to vector<16x1xi32>
      %124 = arith.cmpi ne, %105, %123 : vector<16x1xi32>
      %cst_59 = arith.constant 0.000000e+00 : f32
      %125 = vector.broadcast %cst_59 : f32 to vector<16x1xf32>
      %126 = arith.select %124, %122, %125 : vector<16x1xi1>, vector<16x1xf32>
      %127 = vector.shape_cast %126 : vector<16x1xf32> to vector<1x16x1xf32>
      %cst_60 = arith.constant dense<0.000000e+00> : vector<1xf32>
      %128 = vector.multi_reduction <add>, %127, %cst_60 [1, 2] : vector<1x16x1xf32> to vector<1xf32>
      %129 = vector.shape_cast %128 : vector<1xf32> to vector<1x1x1xf32>
      %130 = vector.extract %129[0, 0, 0] : f32 from vector<1x1x1xf32>
      %cst_61 = arith.constant 1.000000e+00 : f32
      %cst_62 = arith.constant 0.000000e+00 : f32
      %131 = vector.broadcast %cst_61 : f32 to vector<16x1xf32>
      %132 = vector.broadcast %cst_62 : f32 to vector<16x1xf32>
      %133 = arith.select %124, %131, %132 : vector<16x1xi1>, vector<16x1xf32>
      %134 = vector.shape_cast %133 : vector<16x1xf32> to vector<1x16x1xf32>
      %cst_63 = arith.constant dense<0.000000e+00> : vector<1xf32>
      %135 = vector.multi_reduction <add>, %134, %cst_63 [1, 2] : vector<1x16x1xf32> to vector<1xf32>
      %136 = vector.shape_cast %135 : vector<1xf32> to vector<1x1x1xf32>
      %137 = vector.extract %136[0, 0, 0] : f32 from vector<1x1x1xf32>
      %c0_64 = arith.constant 0 : index
      %c4 = arith.constant 4 : index
      %c0_65 = arith.constant 0 : index
      %138 = vector.load %arg10[%c0_64, %c4, %c0_65] : memref<1x8x128xf32, #tpu.memory_space<vmem>>, vector<1x1x128xf32>
      %139 = vector.shape_cast %138 : vector<1x1x128xf32> to vector<128xf32>
      %140 = vector.broadcast %130 : f32 to vector<128xf32>
      %141 = arith.addf %139, %140 : vector<128xf32>
      %c0_66 = arith.constant 0 : index
      %c4_67 = arith.constant 4 : index
      %c0_68 = arith.constant 0 : index
      %142 = vector.load %arg10[%c0_66, %c4_67, %c0_68] : memref<1x8x128xf32, #tpu.memory_space<vmem>>, vector<1x1x128xf32>
      %143 = vector.shape_cast %142 : vector<1x1x128xf32> to vector<128xf32>
      %144 = vector.shape_cast %141 : vector<128xf32> to vector<1x1x128xf32>
      tpu.vector_store %arg10[%c0_66, %c4_67, %c0_68], %144 {strides = array<i32>} : memref<1x8x128xf32, #tpu.memory_space<vmem>>, vector<1x1x128xf32>,
      %c0_69 = arith.constant 0 : index
      %c5 = arith.constant 5 : index
      %c0_70 = arith.constant 0 : index
      %145 = vector.load %arg10[%c0_69, %c5, %c0_70] : memref<1x8x128xf32, #tpu.memory_space<vmem>>, vector<1x1x128xf32>
      %146 = vector.shape_cast %145 : vector<1x1x128xf32> to vector<128xf32>
      %147 = vector.broadcast %137 : f32 to vector<128xf32>
      %148 = arith.addf %146, %147 : vector<128xf32>
      %c0_71 = arith.constant 0 : index
      %c5_72 = arith.constant 5 : index
      %c0_73 = arith.constant 0 : index
      %149 = vector.load %arg10[%c0_71, %c5_72, %c0_73] : memref<1x8x128xf32, #tpu.memory_space<vmem>>, vector<1x1x128xf32>
      %150 = vector.shape_cast %149 : vector<1x1x128xf32> to vector<128xf32>
      %151 = vector.shape_cast %148 : vector<128xf32> to vector<1x1x128xf32>
      tpu.vector_store %arg10[%c0_71, %c5_72, %c0_73], %151 {strides = array<i32>} : memref<1x8x128xf32, #tpu.memory_space<vmem>>, vector<1x1x128xf32>,
      %c0_74 = arith.constant 0 : index
      %c0_75 = arith.constant 0 : index
      %152 = vector.load %arg8[%c0_74, %c0_75] : memref<16x48xf32, #tpu.memory_space<vmem>>, vector<16x48xf32>
      %c0_76 = arith.constant 0 : index
      %c0_77 = arith.constant 0 : index
      %153 = vector.load %arg9[%c0_76, %c0_77] : memref<16x1xi32, #tpu.memory_space<vmem>>, vector<16x1xi32>
      %cst_78 = arith.constant dense<0xFF800000> : vector<16xf32>
      %154 = vector.multi_reduction <maximumf>, %152, %cst_78 [1] : vector<16x48xf32> to vector<16xf32>
      %155 = vector.shape_cast %154 : vector<16xf32> to vector<16x1xf32>
      %156 = vector.broadcast %155 : vector<16x1xf32> to vector<16x48xf32>
      %157 = arith.subf %152, %156 : vector<16x48xf32>
      %158 = math.exp %157 : vector<16x48xf32>
      %cst_79 = arith.constant dense<0.000000e+00> : vector<16xf32>
      %159 = vector.multi_reduction <add>, %158, %cst_79 [1] : vector<16x48xf32> to vector<16xf32>
      %160 = vector.shape_cast %159 : vector<16xf32> to vector<16x1xf32>
      %161 = math.log %160 : vector<16x1xf32>
      %162 = arith.addf %161, %155 : vector<16x1xf32>
      %163 = tpu.iota {dimensions = array<i32: 1>} : vector<16x48xi32>
      %164 = vector.broadcast %153 : vector<16x1xi32> to vector<16x48xi32>
      %165 = arith.cmpi eq, %163, %164 : vector<16x48xi32>
      %cst_80 = arith.constant 0.000000e+00 : f32
      %166 = vector.broadcast %cst_80 : f32 to vector<16x48xf32>
      %167 = arith.select %165, %152, %166 : vector<16x48xi1>, vector<16x48xf32>
      %cst_81 = arith.constant dense<0.000000e+00> : vector<16xf32>
      %168 = vector.multi_reduction <add>, %167, %cst_81 [1] : vector<16x48xf32> to vector<16xf32>
      %169 = vector.shape_cast %168 : vector<16xf32> to vector<16x1xf32>
      %170 = arith.subf %162, %169 : vector<16x1xf32>
      %c0_i32_82 = arith.constant 0 : i32
      %171 = vector.broadcast %c0_i32_82 : i32 to vector<16x1xi32>
      %172 = arith.cmpi ne, %153, %171 : vector<16x1xi32>
      %cst_83 = arith.constant 0.000000e+00 : f32
      %173 = vector.broadcast %cst_83 : f32 to vector<16x1xf32>
      %174 = arith.select %172, %170, %173 : vector<16x1xi1>, vector<16x1xf32>
      %175 = vector.shape_cast %174 : vector<16x1xf32> to vector<1x16x1xf32>
      %cst_84 = arith.constant dense<0.000000e+00> : vector<1xf32>
      %176 = vector.multi_reduction <add>, %175, %cst_84 [1, 2] : vector<1x16x1xf32> to vector<1xf32>
      %177 = vector.shape_cast %176 : vector<1xf32> to vector<1x1x1xf32>
      %178 = vector.extract %177[0, 0, 0] : f32 from vector<1x1x1xf32>
      %cst_85 = arith.constant 1.000000e+00 : f32
      %cst_86 = arith.constant 0.000000e+00 : f32
      %179 = vector.broadcast %cst_85 : f32 to vector<16x1xf32>
      %180 = vector.broadcast %cst_86 : f32 to vector<16x1xf32>
      %181 = arith.select %172, %179, %180 : vector<16x1xi1>, vector<16x1xf32>
      %182 = vector.shape_cast %181 : vector<16x1xf32> to vector<1x16x1xf32>
      %cst_87 = arith.constant dense<0.000000e+00> : vector<1xf32>
      %183 = vector.multi_reduction <add>, %182, %cst_87 [1, 2] : vector<1x16x1xf32> to vector<1xf32>
      %184 = vector.shape_cast %183 : vector<1xf32> to vector<1x1x1xf32>
      %185 = vector.extract %184[0, 0, 0] : f32 from vector<1x1x1xf32>
      %c0_88 = arith.constant 0 : index
      %c6 = arith.constant 6 : index
      %c0_89 = arith.constant 0 : index
      %186 = vector.load %arg10[%c0_88, %c6, %c0_89] : memref<1x8x128xf32, #tpu.memory_space<vmem>>, vector<1x1x128xf32>
      %187 = vector.shape_cast %186 : vector<1x1x128xf32> to vector<128xf32>
      %188 = vector.broadcast %178 : f32 to vector<128xf32>
      %189 = arith.addf %187, %188 : vector<128xf32>
      %c0_90 = arith.constant 0 : index
      %c6_91 = arith.constant 6 : index
      %c0_92 = arith.constant 0 : index
      %190 = vector.load %arg10[%c0_90, %c6_91, %c0_92] : memref<1x8x128xf32, #tpu.memory_space<vmem>>, vector<1x1x128xf32>
      %191 = vector.shape_cast %190 : vector<1x1x128xf32> to vector<128xf32>
      %192 = vector.shape_cast %189 : vector<128xf32> to vector<1x1x128xf32>
      tpu.vector_store %arg10[%c0_90, %c6_91, %c0_92], %192 {strides = array<i32>} : memref<1x8x128xf32, #tpu.memory_space<vmem>>, vector<1x1x128xf32>,
      %c0_93 = arith.constant 0 : index
      %c7 = arith.constant 7 : index
      %c0_94 = arith.constant 0 : index
      %193 = vector.load %arg10[%c0_93, %c7, %c0_94] : memref<1x8x128xf32, #tpu.memory_space<vmem>>, vector<1x1x128xf32>
      %194 = vector.shape_cast %193 : vector<1x1x128xf32> to vector<128xf32>
      %195 = vector.broadcast %185 : f32 to vector<128xf32>
      %196 = arith.addf %194, %195 : vector<128xf32>
      %c0_95 = arith.constant 0 : index
      %c7_96 = arith.constant 7 : index
      %c0_97 = arith.constant 0 : index
      %197 = vector.load %arg10[%c0_95, %c7_96, %c0_97] : memref<1x8x128xf32, #tpu.memory_space<vmem>>, vector<1x1x128xf32>
      %198 = vector.shape_cast %197 : vector<1x1x128xf32> to vector<128xf32>
      %199 = vector.shape_cast %196 : vector<128xf32> to vector<1x1x128xf32>
      tpu.vector_store %arg10[%c0_95, %c7_96, %c0_97], %199 {strides = array<i32>} : memref<1x8x128xf32, #tpu.memory_space<vmem>>, vector<1x1x128xf32>,
    } else {
    }
    return
  }
  func.func @transform_0(%arg0: i32, %arg1: i32) -> (i32, i32) {
    %c1_i32 = arith.constant 1 : i32
    %0 = arith.muli %arg0, %c1_i32 : i32
    %1 = arith.addi %0, %arg1 : i32
    %c0_i32 = arith.constant 0 : i32
    %2 = arith.minsi %1, %c0_i32 : i32
    %c0_i32_0 = arith.constant 0 : i32
    %c0_i32_1 = arith.constant 0 : i32
    return %2, %c0_i32_0 : i32, i32
  }
  func.func @transform_1(%arg0: i32, %arg1: i32) -> (i32, i32) {
    %c1_i32 = arith.constant 1 : i32
    %0 = arith.muli %arg0, %c1_i32 : i32
    %1 = arith.addi %0, %arg1 : i32
    %c0_i32 = arith.constant 0 : i32
    %2 = arith.minsi %1, %c0_i32 : i32
    %c0_i32_0 = arith.constant 0 : i32
    %c0_i32_1 = arith.constant 0 : i32
    return %2, %c0_i32_0 : i32, i32
  }
  func.func @transform_2(%arg0: i32, %arg1: i32) -> (i32, i32) {
    %c1_i32 = arith.constant 1 : i32
    %0 = arith.muli %arg0, %c1_i32 : i32
    %1 = arith.addi %0, %arg1 : i32
    %c0_i32 = arith.constant 0 : i32
    %2 = arith.minsi %1, %c0_i32 : i32
    %c0_i32_0 = arith.constant 0 : i32
    %c0_i32_1 = arith.constant 0 : i32
    return %2, %c0_i32_0 : i32, i32
  }
  func.func @transform_3(%arg0: i32, %arg1: i32) -> (i32, i32) {
    %c1_i32 = arith.constant 1 : i32
    %0 = arith.muli %arg0, %c1_i32 : i32
    %1 = arith.addi %0, %arg1 : i32
    %c0_i32 = arith.constant 0 : i32
    %2 = arith.minsi %1, %c0_i32 : i32
    %c0_i32_0 = arith.constant 0 : i32
    %c0_i32_1 = arith.constant 0 : i32
    return %2, %c0_i32_0 : i32, i32
  }
  func.func @transform_4(%arg0: i32, %arg1: i32) -> (i32, i32) {
    %c1_i32 = arith.constant 1 : i32
    %0 = arith.muli %arg0, %c1_i32 : i32
    %1 = arith.addi %0, %arg1 : i32
    %c0_i32 = arith.constant 0 : i32
    %2 = arith.minsi %1, %c0_i32 : i32
    %c0_i32_0 = arith.constant 0 : i32
    %c0_i32_1 = arith.constant 0 : i32
    return %2, %c0_i32_0 : i32, i32
  }
  func.func @transform_5(%arg0: i32, %arg1: i32) -> (i32, i32) {
    %c1_i32 = arith.constant 1 : i32
    %0 = arith.muli %arg0, %c1_i32 : i32
    %1 = arith.addi %0, %arg1 : i32
    %c0_i32 = arith.constant 0 : i32
    %2 = arith.minsi %1, %c0_i32 : i32
    %c0_i32_0 = arith.constant 0 : i32
    %c0_i32_1 = arith.constant 0 : i32
    return %2, %c0_i32_0 : i32, i32
  }
  func.func @transform_6(%arg0: i32, %arg1: i32) -> (i32, i32) {
    %c1_i32 = arith.constant 1 : i32
    %0 = arith.muli %arg0, %c1_i32 : i32
    %1 = arith.addi %0, %arg1 : i32
    %c0_i32 = arith.constant 0 : i32
    %2 = arith.minsi %1, %c0_i32 : i32
    %c0_i32_0 = arith.constant 0 : i32
    %c0_i32_1 = arith.constant 0 : i32
    return %2, %c0_i32_0 : i32, i32
  }
  func.func @transform_7(%arg0: i32, %arg1: i32) -> (i32, i32) {
    %c1_i32 = arith.constant 1 : i32
    %0 = arith.muli %arg0, %c1_i32 : i32
    %1 = arith.addi %0, %arg1 : i32
    %c0_i32 = arith.constant 0 : i32
    %2 = arith.minsi %1, %c0_i32 : i32
    %c0_i32_0 = arith.constant 0 : i32
    %c0_i32_1 = arith.constant 0 : i32
    return %2, %c0_i32_0 : i32, i32
  }
  func.func @transform_8(%arg0: i32, %arg1: i32) -> (i32, i32, i32) {
    %c0_i32 = arith.constant 0 : i32
    %c0_i32_0 = arith.constant 0 : i32
    %c0_i32_1 = arith.constant 0 : i32
    return %arg0, %c0_i32, %c0_i32_0 : i32, i32, i32
  }
}

</mosaic_0001>

<llo_original>
// kernel: tpu_custom_call.1
$region0: #{tpu_custom_call.1}
  #allocation0 [shape = 'u32[]', space=smem, size = 0x4, offset = 0x4, fixed_abs, tag = 'smem constant byte address 0x4 - core index']
  #allocation1 [shape = 'u32[144,128]{1,0:T(1,128)}', space=vmem, size = 0x12000, scoped, tag = 'internal scratch']
  %s0 = inlined_call_operand.vmem [shape: f32[16,32], index: 0, kind: input, shape index: {}]
  %s1 = inlined_call_operand.vmem [shape: s32[16,1], index: 1, kind: input, shape index: {}]
  %s2 = inlined_call_operand.vmem [shape: f32[16,24], index: 2, kind: input, shape index: {}]
  %s3 = inlined_call_operand.vmem [shape: s32[16,1], index: 3, kind: input, shape index: {}]
  %s4 = inlined_call_operand.vmem [shape: f32[16,40], index: 4, kind: input, shape index: {}]
  %s5 = inlined_call_operand.vmem [shape: s32[16,1], index: 5, kind: input, shape index: {}]
  %s6 = inlined_call_operand.vmem [shape: f32[16,48], index: 6, kind: input, shape index: {}]
  %s7 = inlined_call_operand.vmem [shape: s32[16,1], index: 7, kind: input, shape index: {}]
  %s8 = inlined_call_operand.hbm [shape: f32[1,8,128], index: 8, kind: output, shape index: {}]
  %s9 = sld [smem:[#allocation0]]
  $region50: #{tpu_custom_call.1} parent=0
    _
  %s11 = ssub.s32 1, %s9
  %s12 = scalar_select 0, %s11, %s9
  $region1: #{tpu_custom_call.1} parent=0
    #allocation2 [shape = 'u8[4096]{0}', space=vmem, size = 0x1000, scoped, tag = 'output window, operand 0, single buffered']
    #allocation3 [shape = 's32[1]{0}', space=sflag, size = 0x4, scoped, tag = 'scoped memory for tpu_custom_call.1']
    %13 = vsyncpa [#allocation3], 0
    // Predicated region
    $region2: #{tpu_custom_call.1} parent=1 // pred_check
      _
    $region3: #{tpu_custom_call.1} parent=1 // pred_check_branch
      %15 = sbr.rel (0) target = $region5
    $region4: #{tpu_custom_call.1} parent=1 // pred_region
      %s16 = sadd.s32 0, 0
      %p17 = scmp.lt.s32.totalorder %s16, 0
      %s18 = scalar_select %p17, %s16, 0
      %s19 = smul.u32 2, %s18
      %p20 = scmp.lt.s32.totalorder %s19, 1
      %s21 = scalar_select %p20, %s19, 1
      %s22 = smul.addr %s21, 8
      %s23 = scalar_lea.vmem %s0, %s22
      %s24 = sadd.s32 0, 0
      %p25 = scmp.lt.s32.totalorder %s24, 0
      %s26 = scalar_select %p25, %s24, 0
      %s27 = smul.u32 2, %s26
    $region5: #{tpu_custom_call.1} parent=1 // pred_fallthru
      _
    // Predicated region
    $region6: #{tpu_custom_call.1} parent=1 // pred_check
      _
    $region7: #{tpu_custom_call.1} parent=1 // pred_check_branch
      %29 = sbr.rel (0) target = $region9
    $region8: #{tpu_custom_call.1} parent=1 // pred_region
      %s30 = sadd.s32 0, 0
      %p31 = scmp.lt.s32.totalorder %s30, 0
      %s32 = scalar_select %p31, %s30, 0
      %s33 = smul.u32 2, %s32
      %p34 = scmp.lt.s32.totalorder %s33, 1
      %s35 = scalar_select %p34, %s33, 1
      %s36 = smul.addr %s35, 8
      %s37 = scalar_lea.vmem %s1, %s36
      %s38 = sadd.s32 0, 0
      %p39 = scmp.lt.s32.totalorder %s38, 0
      %s40 = scalar_select %p39, %s38, 0
      %s41 = smul.u32 2, %s40
    $region9: #{tpu_custom_call.1} parent=1 // pred_fallthru
      _
    // Predicated region
    $region10: #{tpu_custom_call.1} parent=1 // pred_check
      _
    $region11: #{tpu_custom_call.1} parent=1 // pred_check_branch
      %43 = sbr.rel (0) target = $region13
    $region12: #{tpu_custom_call.1} parent=1 // pred_region
      %s44 = sadd.s32 0, 0
      %p45 = scmp.lt.s32.totalorder %s44, 0
      %s46 = scalar_select %p45, %s44, 0
      %s47 = smul.u32 2, %s46
      %p48 = scmp.lt.s32.totalorder %s47, 1
      %s49 = scalar_select %p48, %s47, 1
      %s50 = smul.addr %s49, 8
      %s51 = scalar_lea.vmem %s2, %s50
      %s52 = sadd.s32 0, 0
      %p53 = scmp.lt.s32.totalorder %s52, 0
      %s54 = scalar_select %p53, %s52, 0
      %s55 = smul.u32 2, %s54
    $region13: #{tpu_custom_call.1} parent=1 // pred_fallthru
      _
    // Predicated region
    $region14: #{tpu_custom_call.1} parent=1 // pred_check
      _
    $region15: #{tpu_custom_call.1} parent=1 // pred_check_branch
      %57 = sbr.rel (0) target = $region17
    $region16: #{tpu_custom_call.1} parent=1 // pred_region
      %s58 = sadd.s32 0, 0
      %p59 = scmp.lt.s32.totalorder %s58, 0
      %s60 = scalar_select %p59, %s58, 0
      %s61 = smul.u32 2, %s60
      %p62 = scmp.lt.s32.totalorder %s61, 1
      %s63 = scalar_select %p62, %s61, 1
      %s64 = smul.addr %s63, 8
      %s65 = scalar_lea.vmem %s3, %s64
      %s66 = sadd.s32 0, 0
      %p67 = scmp.lt.s32.totalorder %s66, 0
      %s68 = scalar_select %p67, %s66, 0
      %s69 = smul.u32 2, %s68
    $region17: #{tpu_custom_call.1} parent=1 // pred_fallthru
      _
    // Predicated region
    $region18: #{tpu_custom_call.1} parent=1 // pred_check
      _
    $region19: #{tpu_custom_call.1} parent=1 // pred_check_branch
      %71 = sbr.rel (0) target = $region21
    $region20: #{tpu_custom_call.1} parent=1 // pred_region
      %s72 = sadd.s32 0, 0
      %p73 = scmp.lt.s32.totalorder %s72, 0
      %s74 = scalar_select %p73, %s72, 0
      %s75 = smul.u32 2, %s74
      %p76 = scmp.lt.s32.totalorder %s75, 1
      %s77 = scalar_select %p76, %s75, 1
      %s78 = smul.addr %s77, 8
      %s79 = scalar_lea.vmem %s4, %s78
      %s80 = sadd.s32 0, 0
      %p81 = scmp.lt.s32.totalorder %s80, 0
      %s82 = scalar_select %p81, %s80, 0
      %s83 = smul.u32 2, %s82
    $region21: #{tpu_custom_call.1} parent=1 // pred_fallthru
      _
    // Predicated region
    $region22: #{tpu_custom_call.1} parent=1 // pred_check
      _
    $region23: #{tpu_custom_call.1} parent=1 // pred_check_branch
      %85 = sbr.rel (0) target = $region25
    $region24: #{tpu_custom_call.1} parent=1 // pred_region
      %s86 = sadd.s32 0, 0
      %p87 = scmp.lt.s32.totalorder %s86, 0
      %s88 = scalar_select %p87, %s86, 0
      %s89 = smul.u32 2, %s88
      %p90 = scmp.lt.s32.totalorder %s89, 1
      %s91 = scalar_select %p90, %s89, 1
      %s92 = smul.addr %s91, 8
      %s93 = scalar_lea.vmem %s5, %s92
      %s94 = sadd.s32 0, 0
      %p95 = scmp.lt.s32.totalorder %s94, 0
      %s96 = scalar_select %p95, %s94, 0
      %s97 = smul.u32 2, %s96
    $region25: #{tpu_custom_call.1} parent=1 // pred_fallthru
      _
    // Predicated region
    $region26: #{tpu_custom_call.1} parent=1 // pred_check
      _
    $region27: #{tpu_custom_call.1} parent=1 // pred_check_branch
      %99 = sbr.rel (0) target = $region29
    $region28: #{tpu_custom_call.1} parent=1 // pred_region
      %s100 = sadd.s32 0, 0
      %p101 = scmp.lt.s32.totalorder %s100, 0
      %s102 = scalar_select %p101, %s100, 0
      %s103 = smul.u32 2, %s102
      %p104 = scmp.lt.s32.totalorder %s103, 1
      %s105 = scalar_select %p104, %s103, 1
      %s106 = smul.addr %s105, 8
      %s107 = scalar_lea.vmem %s6, %s106
      %s108 = sadd.s32 0, 0
      %p109 = scmp.lt.s32.totalorder %s108, 0
      %s110 = scalar_select %p109, %s108, 0
      %s111 = smul.u32 2, %s110
    $region29: #{tpu_custom_call.1} parent=1 // pred_fallthru
      _
    // Predicated region
    $region30: #{tpu_custom_call.1} parent=1 // pred_check
      _
    $region31: #{tpu_custom_call.1} parent=1 // pred_check_branch
      %113 = sbr.rel (0) target = $region33
    $region32: #{tpu_custom_call.1} parent=1 // pred_region
      %s114 = sadd.s32 0, 0
      %p115 = scmp.lt.s32.totalorder %s114, 0
      %s116 = scalar_select %p115, %s114, 0
      %s117 = smul.u32 2, %s116
      %p118 = scmp.lt.s32.totalorder %s117, 1
      %s119 = scalar_select %p118, %s117, 1
      %s120 = smul.addr %s119, 8
      %s121 = scalar_lea.vmem %s7, %s120
      %s122 = sadd.s32 0, 0
      %p123 = scmp.lt.s32.totalorder %s122, 0
      %s124 = scalar_select %p123, %s122, 0
      %s125 = smul.u32 2, %s124
    $region33: #{tpu_custom_call.1} parent=1 // pred_fallthru
      _
    %s126 = sadd.s32 0, 0
    %p127 = scmp.lt.s32.totalorder %s126, 0
    %s128 = scalar_select %p127, %s126, 0
    %s129 = smul.u32 2, %s128
    %p130 = scmp.lt.s32.totalorder %s129, 1
    %s131 = scalar_select %p130, %s129, 1
    %s132 = smul.addr %s131, 8
    %s133 = scalar_lea.vmem %s0, %s132
    %s134 = sadd.s32 0, 0
    %p135 = scmp.lt.s32.totalorder %s134, 0
    %s136 = scalar_select %p135, %s134, 0
    %s137 = smul.u32 2, %s136
    %p138 = scmp.lt.s32.totalorder %s137, 1
    %s139 = scalar_select %p138, %s137, 1
    %s140 = smul.addr %s139, 8
    %s141 = scalar_lea.vmem %s1, %s140
    %s142 = sadd.s32 0, 0
    %p143 = scmp.lt.s32.totalorder %s142, 0
    %s144 = scalar_select %p143, %s142, 0
    %s145 = smul.u32 2, %s144
    %p146 = scmp.lt.s32.totalorder %s145, 1
    %s147 = scalar_select %p146, %s145, 1
    %s148 = smul.addr %s147, 8
    %s149 = scalar_lea.vmem %s2, %s148
    %s150 = sadd.s32 0, 0
    %p151 = scmp.lt.s32.totalorder %s150, 0
    %s152 = scalar_select %p151, %s150, 0
    %s153 = smul.u32 2, %s152
    %p154 = scmp.lt.s32.totalorder %s153, 1
    %s155 = scalar_select %p154, %s153, 1
    %s156 = smul.addr %s155, 8
    %s157 = scalar_lea.vmem %s3, %s156
    %s158 = sadd.s32 0, 0
    %p159 = scmp.lt.s32.totalorder %s158, 0
    %s160 = scalar_select %p159, %s158, 0
    %s161 = smul.u32 2, %s160
    %p162 = scmp.lt.s32.totalorder %s161, 1
    %s163 = scalar_select %p162, %s161, 1
    %s164 = smul.addr %s163, 8
    %s165 = scalar_lea.vmem %s4, %s164
    %s166 = sadd.s32 0, 0
    %p167 = scmp.lt.s32.totalorder %s166, 0
    %s168 = scalar_select %p167, %s166, 0
    %s169 = smul.u32 2, %s168
    %p170 = scmp.lt.s32.totalorder %s169, 1
    %s171 = scalar_select %p170, %s169, 1
    %s172 = smul.addr %s171, 8
    %s173 = scalar_lea.vmem %s5, %s172
    %s174 = sadd.s32 0, 0
    %p175 = scmp.lt.s32.totalorder %s174, 0
    %s176 = scalar_select %p175, %s174, 0
    %s177 = smul.u32 2, %s176
    %p178 = scmp.lt.s32.totalorder %s177, 1
    %s179 = scalar_select %p178, %s177, 1
    %s180 = smul.addr %s179, 8
    %s181 = scalar_lea.vmem %s6, %s180
    %s182 = sadd.s32 0, 0
    %p183 = scmp.lt.s32.totalorder %s182, 0
    %s184 = scalar_select %p183, %s182, 0
    %s185 = smul.u32 2, %s184
    %p186 = scmp.lt.s32.totalorder %s185, 1
    %s187 = scalar_select %p186, %s185, 1
    %s188 = smul.addr %s187, 8
    %s189 = scalar_lea.vmem %s7, %s188
    %s190 = sadd.s32 0, 0
    %p191 = scmp.lt.s32.totalorder %s190, 0
    %s192 = scalar_select %p191, %s190, 0
    %s193 = smul.u32 2, %s192
    %p194 = scmp.lt.s32.totalorder %s193, 1
    %s195 = scalar_select %p194, %s193, 1
    %s196 = smul.addr %s195, 8
    %s197 = scalar_lea.vmem %s0, %s196
    %s198 = sadd.s32 0, 0
    %p199 = scmp.lt.s32.totalorder %s198, 0
    %s200 = scalar_select %p199, %s198, 0
    %s201 = smul.u32 2, %s200
    %s202 = sadd.s32 0, 0
    %p203 = scmp.lt.s32.totalorder %s202, 0
    %s204 = scalar_select %p203, %s202, 0
    %s205 = smul.u32 2, %s204
    %p206 = scmp.lt.s32.totalorder %s205, 1
    %s207 = scalar_select %p206, %s205, 1
    %s208 = smul.addr %s207, 8
    %s209 = scalar_lea.vmem %s1, %s208
    %s210 = sadd.s32 0, 0
    %p211 = scmp.lt.s32.totalorder %s210, 0
    %s212 = scalar_select %p211, %s210, 0
    %s213 = smul.u32 2, %s212
    %s214 = sadd.s32 0, 0
    %p215 = scmp.lt.s32.totalorder %s214, 0
    %s216 = scalar_select %p215, %s214, 0
    %s217 = smul.u32 2, %s216
    %p218 = scmp.lt.s32.totalorder %s217, 1
    %s219 = scalar_select %p218, %s217, 1
    %s220 = smul.addr %s219, 8
    %s221 = scalar_lea.vmem %s2, %s220
    %s222 = sadd.s32 0, 0
    %p223 = scmp.lt.s32.totalorder %s222, 0
    %s224 = scalar_select %p223, %s222, 0
    %s225 = smul.u32 2, %s224
    %s226 = sadd.s32 0, 0
    %p227 = scmp.lt.s32.totalorder %s226, 0
    %s228 = scalar_select %p227, %s226, 0
    %s229 = smul.u32 2, %s228
    %p230 = scmp.lt.s32.totalorder %s229, 1
    %s231 = scalar_select %p230, %s229, 1
    %s232 = smul.addr %s231, 8
    %s233 = scalar_lea.vmem %s3, %s232
    %s234 = sadd.s32 0, 0
    %p235 = scmp.lt.s32.totalorder %s234, 0
    %s236 = scalar_select %p235, %s234, 0
    %s237 = smul.u32 2, %s236
    %s238 = sadd.s32 0, 0
    %p239 = scmp.lt.s32.totalorder %s238, 0
    %s240 = scalar_select %p239, %s238, 0
    %s241 = smul.u32 2, %s240
    %p242 = scmp.lt.s32.totalorder %s241, 1
    %s243 = scalar_select %p242, %s241, 1
    %s244 = smul.addr %s243, 8
    %s245 = scalar_lea.vmem %s4, %s244
    %s246 = sadd.s32 0, 0
    %p247 = scmp.lt.s32.totalorder %s246, 0
    %s248 = scalar_select %p247, %s246, 0
    %s249 = smul.u32 2, %s248
    %s250 = sadd.s32 0, 0
    %p251 = scmp.lt.s32.totalorder %s250, 0
    %s252 = scalar_select %p251, %s250, 0
    %s253 = smul.u32 2, %s252
    %p254 = scmp.lt.s32.totalorder %s253, 1
    %s255 = scalar_select %p254, %s253, 1
    %s256 = smul.addr %s255, 8
    %s257 = scalar_lea.vmem %s5, %s256
    %s258 = sadd.s32 0, 0
    %p259 = scmp.lt.s32.totalorder %s258, 0
    %s260 = scalar_select %p259, %s258, 0
    %s261 = smul.u32 2, %s260
    %s262 = sadd.s32 0, 0
    %p263 = scmp.lt.s32.totalorder %s262, 0
    %s264 = scalar_select %p263, %s262, 0
    %s265 = smul.u32 2, %s264
    %p266 = scmp.lt.s32.totalorder %s265, 1
    %s267 = scalar_select %p266, %s265, 1
    %s268 = smul.addr %s267, 8
    %s269 = scalar_lea.vmem %s6, %s268
    %s270 = sadd.s32 0, 0
    %p271 = scmp.lt.s32.totalorder %s270, 0
    %s272 = scalar_select %p271, %s270, 0
    %s273 = smul.u32 2, %s272
    %s274 = sadd.s32 0, 0
    %p275 = scmp.lt.s32.totalorder %s274, 0
    %s276 = scalar_select %p275, %s274, 0
    %s277 = smul.u32 2, %s276
    %p278 = scmp.lt.s32.totalorder %s277, 1
    %s279 = scalar_select %p278, %s277, 1
    %s280 = smul.addr %s279, 8
    %s281 = scalar_lea.vmem %s7, %s280
    %s282 = sadd.s32 0, 0
    %p283 = scmp.lt.s32.totalorder %s282, 0
    %s284 = scalar_select %p283, %s282, 0
    %s285 = smul.u32 2, %s284
    %s286 = sadd.s32 0, 0
    %p287 = scmp.eq.s32.totalorder 0, 0
    // Predicated region
    $region34: #{tpu_custom_call.1} parent=1 // pred_check
      %p288 = pneg %p287
    $region35: #{tpu_custom_call.1} parent=1 // pred_check_branch
      %290 = sbr.rel (%p288) target = $region37
    $region36: #{tpu_custom_call.1} parent=1 // pred_region
      %291 = vst [vmem:[#allocation2] sm:$0xff] 0.0
    $region37: #{tpu_custom_call.1} parent=1 // pred_fallthru
      _
    %p292 = scmp.lt.s32.totalorder %s286, 1
    // Predicated region
    $region38: #{tpu_custom_call.1} parent=1 // pred_check
      %p293 = pneg %p292
    $region39: #{tpu_custom_call.1} parent=1 // pred_check_branch
      %295 = sbr.rel (%p293) target = $region41
    $region40: #{tpu_custom_call.1} parent=1 // pred_region
      %v296 = vld [vmem:[%s197] sm:$0xff]
      %v297 = vld [vmem:[%s197 + $0x8] sm:$0xff]
      %v298 = vld [vmem:[%s209] sm:$0xff]
      %v299 = vld [vmem:[%s209 + $0x8] sm:$0xff]
      %vm300 = vcmask 261120
      %v301 = vsel %vm300, %v296, -inf
      %302 = vmax.xlane.f32.xlu0 %v301
      %v303 = vpop.xlane.xlu0 %302
      %v304 = vsel %vm300, %v297, -inf
      %305 = vmax.xlane.f32.xlu0 %v304
      %v306 = vpop.xlane.xlu0 %305
      %v307 = vsub.f32 %v296, %v303
      %v308 = vsub.f32 %v297, %v306
      %v309 = vmul.f32 %v307, 1.442695
      %v310 = vpow.pop %v309
      %v311 = vmul.f32 %v308, 1.442695
      %v312 = vpow.pop %v311
      %v313 = vsel %vm300, %v310, 0.0
      %314 = vadd.xlane.f32.xlu0 %v313
      %v315 = vpop.xlane.xlu0 %314
      %v316 = vsel %vm300, %v312, 0.0
      %317 = vadd.xlane.f32.xlu0 %v316
      %v318 = vpop.xlane.xlu0 %317
      %v319 = vlog2.pop %v315
      %v320 = vmul.f32 %v319, 0.6931472
      %v321 = vlog2.pop %v318
      %v322 = vmul.f32 %v321, 0.6931472
      %v323 = vadd.f32 %v320, %v303
      %v324 = vadd.f32 %v322, %v306
      %v325 = vlaneseq
      %v326 = vand.u32 %v325, 127
      %327 = vset.pattern.permute.xlu0 0
      %328 = vperm.xlu0 %327, %v298
      %v329 = vpop.permute.xlu0 %328
      %330 = vset.pattern.permute.xlu0 0
      %331 = vperm.xlu0 %330, %v299
      %v332 = vpop.permute.xlu0 %331
      %vm333 = vcmp.eq.s32.totalorder %v326, %v329
      %vm334 = vcmp.eq.s32.totalorder %v326, %v332
      %v335 = vsel %vm333, %v296, 0.0
      %v336 = vsel %vm334, %v297, 0.0
      %v337 = vsel %vm300, %v335, 0.0
      %338 = vadd.xlane.f32.xlu0 %v337
      %v339 = vpop.xlane.xlu0 %338
      %v340 = vsel %vm300, %v336, 0.0
      %341 = vadd.xlane.f32.xlu0 %v340
      %v342 = vpop.xlane.xlu0 %341
      %v343 = vsub.f32 %v323, %v339
      %v344 = vsub.f32 %v324, %v342
      %vm345 = vcmp.ne.s32.totalorder %v298, 0
      %vm346 = vcmp.ne.s32.totalorder %v299, 0
      %v347 = vsel %vm345, %v343, 0.0
      %v348 = vsel %vm346, %v344, 0.0
      %vm349 = vcmask 7168
      %v350 = vsel %vm349, %v347, 0.0
      %v351 = vsel %vm349, %v348, 0.0
      %v352 = vadd.f32 %v350, %v351
      %353 = vadd.xlane.f32.xlu0 %v352
      %v354 = vpop.xlane.xlu0 %353
      %v355 = vrot.slane %v354, 4
      %v356 = vadd.f32 %v354, %v355
      %v357 = vrot.slane %v356, 2
      %v358 = vadd.f32 %v356, %v357
      %v359 = vrot.slane %v358, 1
      %v360 = vadd.f32 %v358, %v359
      %s361 = vtos %v360
      %v362 = vsel %vm345, 1.0, 0.0
      %v363 = vsel %vm346, 1.0, 0.0
      %v364 = vsel %vm349, %v362, 0.0
      %v365 = vsel %vm349, %v363, 0.0
      %v366 = vadd.f32 %v364, %v365
      %367 = vadd.xlane.f32.xlu0 %v366
      %v368 = vpop.xlane.xlu0 %367
      %v369 = vrot.slane %v368, 4
      %v370 = vadd.f32 %v368, %v369
      %v371 = vrot.slane %v370, 2
      %v372 = vadd.f32 %v370, %v371
      %v373 = vrot.slane %v372, 1
      %v374 = vadd.f32 %v372, %v373
      %s375 = vtos %v374
      %v376 = vld [vmem:[#allocation2] sm:$0x1]
      %v377 = vstv %s361
      %v378 = vadd.f32 %v376, %v377
      %379 = vst [vmem:[#allocation2] sm:$0x1] %v378
      %v380 = vld [vmem:[#allocation2 + $0x1] sm:$0x1]
      %v381 = vstv %s375
      %v382 = vadd.f32 %v380, %v381
      %383 = vst [vmem:[#allocation2 + $0x1] sm:$0x1] %v382
      %v384 = vld [vmem:[%s221] sm:$0xff]
      %v385 = vld [vmem:[%s221 + $0x8] sm:$0xff]
      %v386 = vld [vmem:[%s233] sm:$0xff]
      %v387 = vld [vmem:[%s233 + $0x8] sm:$0xff]
      %vm388 = vcmask 195584
      %v389 = vsel %vm388, %v384, -inf
      %390 = vmax.xlane.f32.xlu0 %v389
      %v391 = vpop.xlane.xlu0 %390
      %v392 = vsel %vm388, %v385, -inf
      %393 = vmax.xlane.f32.xlu0 %v392
      %v394 = vpop.xlane.xlu0 %393
      %v395 = vsub.f32 %v384, %v391
      %v396 = vsub.f32 %v385, %v394
      %v397 = vmul.f32 %v395, 1.442695
      %v398 = vpow.pop %v397
      %v399 = vmul.f32 %v396, 1.442695
      %v400 = vpow.pop %v399
      %v401 = vsel %vm388, %v398, 0.0
      %402 = vadd.xlane.f32.xlu0 %v401
      %v403 = vpop.xlane.xlu0 %402
      %v404 = vsel %vm388, %v400, 0.0
      %405 = vadd.xlane.f32.xlu0 %v404
      %v406 = vpop.xlane.xlu0 %405
      %v407 = vlog2.pop %v403
      %v408 = vmul.f32 %v407, 0.6931472
      %v409 = vlog2.pop %v406
      %v410 = vmul.f32 %v409, 0.6931472
      %v411 = vadd.f32 %v408, %v391
      %v412 = vadd.f32 %v410, %v394
      %413 = vset.pattern.permute.xlu0 0
      %414 = vperm.xlu0 %413, %v386
      %v415 = vpop.permute.xlu0 %414
      %416 = vset.pattern.permute.xlu0 0
      %417 = vperm.xlu0 %416, %v387
      %v418 = vpop.permute.xlu0 %417
      %vm419 = vcmp.eq.s32.totalorder %v326, %v415
      %vm420 = vcmp.eq.s32.totalorder %v326, %v418
      %v421 = vsel %vm419, %v384, 0.0
      %v422 = vsel %vm420, %v385, 0.0
      %v423 = vsel %vm388, %v421, 0.0
      %424 = vadd.xlane.f32.xlu0 %v423
      %v425 = vpop.xlane.xlu0 %424
      %v426 = vsel %vm388, %v422, 0.0
      %427 = vadd.xlane.f32.xlu0 %v426
      %v428 = vpop.xlane.xlu0 %427
      %v429 = vsub.f32 %v411, %v425
      %v430 = vsub.f32 %v412, %v428
      %vm431 = vcmp.ne.s32.totalorder %v386, 0
      %vm432 = vcmp.ne.s32.totalorder %v387, 0
      %v433 = vsel %vm431, %v429, 0.0
      %v434 = vsel %vm432, %v430, 0.0
      %v435 = vsel %vm349, %v433, 0.0
      %v436 = vsel %vm349, %v434, 0.0
      %v437 = vadd.f32 %v435, %v436
      %438 = vadd.xlane.f32.xlu0 %v437
      %v439 = vpop.xlane.xlu0 %438
      %v440 = vrot.slane %v439, 4
      %v441 = vadd.f32 %v439, %v440
      %v442 = vrot.slane %v441, 2
      %v443 = vadd.f32 %v441, %v442
      %v444 = vrot.slane %v443, 1
      %v445 = vadd.f32 %v443, %v444
      %s446 = vtos %v445
      %v447 = vsel %vm431, 1.0, 0.0
      %v448 = vsel %vm432, 1.0, 0.0
      %v449 = vsel %vm349, %v447, 0.0
      %v450 = vsel %vm349, %v448, 0.0
      %v451 = vadd.f32 %v449, %v450
      %452 = vadd.xlane.f32.xlu0 %v451
      %v453 = vpop.xlane.xlu0 %452
      %v454 = vrot.slane %v453, 4
      %v455 = vadd.f32 %v453, %v454
      %v456 = vrot.slane %v455, 2
      %v457 = vadd.f32 %v455, %v456
      %v458 = vrot.slane %v457, 1
      %v459 = vadd.f32 %v457, %v458
      %s460 = vtos %v459
      %v461 = vld [vmem:[#allocation2 + $0x2] sm:$0x1]
      %v462 = vstv %s446
      %v463 = vadd.f32 %v461, %v462
      %464 = vst [vmem:[#allocation2 + $0x2] sm:$0x1] %v463
      %v465 = vld [vmem:[#allocation2 + $0x3] sm:$0x1]
      %v466 = vstv %s460
      %v467 = vadd.f32 %v465, %v466
      %468 = vst [vmem:[#allocation2 + $0x3] sm:$0x1] %v467
      %v469 = vld [vmem:[%s245] sm:$0xff]
      %v470 = vld [vmem:[%s245 + $0x8] sm:$0xff]
      %v471 = vld [vmem:[%s257] sm:$0xff]
      %v472 = vld [vmem:[%s257 + $0x8] sm:$0xff]
      %vm473 = vcmask 326656
      %v474 = vsel %vm473, %v469, -inf
      %475 = vmax.xlane.f32.xlu0 %v474
      %v476 = vpop.xlane.xlu0 %475
      %v477 = vsel %vm473, %v470, -inf
      %478 = vmax.xlane.f32.xlu0 %v477
      %v479 = vpop.xlane.xlu0 %478
      %v480 = vsub.f32 %v469, %v476
      %v481 = vsub.f32 %v470, %v479
      %v482 = vmul.f32 %v480, 1.442695
      %v483 = vpow.pop %v482
      %v484 = vmul.f32 %v481, 1.442695
      %v485 = vpow.pop %v484
      %v486 = vsel %vm473, %v483, 0.0
      %487 = vadd.xlane.f32.xlu0 %v486
      %v488 = vpop.xlane.xlu0 %487
      %v489 = vsel %vm473, %v485, 0.0
      %490 = vadd.xlane.f32.xlu0 %v489
      %v491 = vpop.xlane.xlu0 %490
      %v492 = vlog2.pop %v488
      %v493 = vmul.f32 %v492, 0.6931472
      %v494 = vlog2.pop %v491
      %v495 = vmul.f32 %v494, 0.6931472
      %v496 = vadd.f32 %v493, %v476
      %v497 = vadd.f32 %v495, %v479
      %498 = vset.pattern.permute.xlu0 0
      %499 = vperm.xlu0 %498, %v471
      %v500 = vpop.permute.xlu0 %499
      %501 = vset.pattern.permute.xlu0 0
      %502 = vperm.xlu0 %501, %v472
      %v503 = vpop.permute.xlu0 %502
      %vm504 = vcmp.eq.s32.totalorder %v326, %v500
      %vm505 = vcmp.eq.s32.totalorder %v326, %v503
      %v506 = vsel %vm504, %v469, 0.0
      %v507 = vsel %vm505, %v470, 0.0
      %v508 = vsel %vm473, %v506, 0.0
      %509 = vadd.xlane.f32.xlu0 %v508
      %v510 = vpop.xlane.xlu0 %509
      %v511 = vsel %vm473, %v507, 0.0
      %512 = vadd.xlane.f32.xlu0 %v511
      %v513 = vpop.xlane.xlu0 %512
      %v514 = vsub.f32 %v496, %v510
      %v515 = vsub.f32 %v497, %v513
      %vm516 = vcmp.ne.s32.totalorder %v471, 0
      %vm517 = vcmp.ne.s32.totalorder %v472, 0
      %v518 = vsel %vm516, %v514, 0.0
      %v519 = vsel %vm517, %v515, 0.0
      %v520 = vsel %vm349, %v518, 0.0
      %v521 = vsel %vm349, %v519, 0.0
      %v522 = vadd.f32 %v520, %v521
      %523 = vadd.xlane.f32.xlu0 %v522
      %v524 = vpop.xlane.xlu0 %523
      %v525 = vrot.slane %v524, 4
      %v526 = vadd.f32 %v524, %v525
      %v527 = vrot.slane %v526, 2
      %v528 = vadd.f32 %v526, %v527
      %v529 = vrot.slane %v528, 1
      %v530 = vadd.f32 %v528, %v529
      %s531 = vtos %v530
      %v532 = vsel %vm516, 1.0, 0.0
      %v533 = vsel %vm517, 1.0, 0.0
      %v534 = vsel %vm349, %v532, 0.0
      %v535 = vsel %vm349, %v533, 0.0
      %v536 = vadd.f32 %v534, %v535
      %537 = vadd.xlane.f32.xlu0 %v536
      %v538 = vpop.xlane.xlu0 %537
      %v539 = vrot.slane %v538, 4
      %v540 = vadd.f32 %v538, %v539
      %v541 = vrot.slane %v540, 2
      %v542 = vadd.f32 %v540, %v541
      %v543 = vrot.slane %v542, 1
      %v544 = vadd.f32 %v542, %v543
      %s545 = vtos %v544
      %v546 = vld [vmem:[#allocation2 + $0x4] sm:$0x1]
      %v547 = vstv %s531
      %v548 = vadd.f32 %v546, %v547
      %549 = vst [vmem:[#allocation2 + $0x4] sm:$0x1] %v548
      %v550 = vld [vmem:[#allocation2 + $0x5] sm:$0x1]
      %v551 = vstv %s545
      %v552 = vadd.f32 %v550, %v551
      %553 = vst [vmem:[#allocation2 + $0x5] sm:$0x1] %v552
      %v554 = vld [vmem:[%s269] sm:$0xff]
      %v555 = vld [vmem:[%s269 + $0x8] sm:$0xff]
      %v556 = vld [vmem:[%s281] sm:$0xff]
      %v557 = vld [vmem:[%s281 + $0x8] sm:$0xff]
      %vm558 = vcmask 392192
      %v559 = vsel %vm558, %v554, -inf
      %560 = vmax.xlane.f32.xlu0 %v559
      %v561 = vpop.xlane.xlu0 %560
      %v562 = vsel %vm558, %v555, -inf
      %563 = vmax.xlane.f32.xlu0 %v562
      %v564 = vpop.xlane.xlu0 %563
      %v565 = vsub.f32 %v554, %v561
      %v566 = vsub.f32 %v555, %v564
      %v567 = vmul.f32 %v565, 1.442695
      %v568 = vpow.pop %v567
      %v569 = vmul.f32 %v566, 1.442695
      %v570 = vpow.pop %v569
      %v571 = vsel %vm558, %v568, 0.0
      %572 = vadd.xlane.f32.xlu0 %v571
      %v573 = vpop.xlane.xlu0 %572
      %v574 = vsel %vm558, %v570, 0.0
      %575 = vadd.xlane.f32.xlu0 %v574
      %v576 = vpop.xlane.xlu0 %575
      %v577 = vlog2.pop %v573
      %v578 = vmul.f32 %v577, 0.6931472
      %v579 = vlog2.pop %v576
      %v580 = vmul.f32 %v579, 0.6931472
      %v581 = vadd.f32 %v578, %v561
      %v582 = vadd.f32 %v580, %v564
      %583 = vset.pattern.permute.xlu0 0
      %584 = vperm.xlu0 %583, %v556
      %v585 = vpop.permute.xlu0 %584
      %586 = vset.pattern.permute.xlu0 0
      %587 = vperm.xlu0 %586, %v557
      %v588 = vpop.permute.xlu0 %587
      %vm589 = vcmp.eq.s32.totalorder %v326, %v585
      %vm590 = vcmp.eq.s32.totalorder %v326, %v588
      %v591 = vsel %vm589, %v554, 0.0
      %v592 = vsel %vm590, %v555, 0.0
      %v593 = vsel %vm558, %v591, 0.0
      %594 = vadd.xlane.f32.xlu0 %v593
      %v595 = vpop.xlane.xlu0 %594
      %v596 = vsel %vm558, %v592, 0.0
      %597 = vadd.xlane.f32.xlu0 %v596
      %v598 = vpop.xlane.xlu0 %597
      %v599 = vsub.f32 %v581, %v595
      %v600 = vsub.f32 %v582, %v598
      %vm601 = vcmp.ne.s32.totalorder %v556, 0
      %vm602 = vcmp.ne.s32.totalorder %v557, 0
      %v603 = vsel %vm601, %v599, 0.0
      %v604 = vsel %vm602, %v600, 0.0
      %v605 = vsel %vm349, %v603, 0.0
      %v606 = vsel %vm349, %v604, 0.0
      %v607 = vadd.f32 %v605, %v606
      %608 = vadd.xlane.f32.xlu0 %v607
      %v609 = vpop.xlane.xlu0 %608
      %v610 = vrot.slane %v609, 4
      %v611 = vadd.f32 %v609, %v610
      %v612 = vrot.slane %v611, 2
      %v613 = vadd.f32 %v611, %v612
      %v614 = vrot.slane %v613, 1
      %v615 = vadd.f32 %v613, %v614
      %s616 = vtos %v615
      %v617 = vsel %vm601, 1.0, 0.0
      %v618 = vsel %vm602, 1.0, 0.0
      %v619 = vsel %vm349, %v617, 0.0
      %v620 = vsel %vm349, %v618, 0.0
      %v621 = vadd.f32 %v619, %v620
      %622 = vadd.xlane.f32.xlu0 %v621
      %v623 = vpop.xlane.xlu0 %622
      %v624 = vrot.slane %v623, 4
      %v625 = vadd.f32 %v623, %v624
      %v626 = vrot.slane %v625, 2
      %v627 = vadd.f32 %v625, %v626
      %v628 = vrot.slane %v627, 1
      %v629 = vadd.f32 %v627, %v628
      %s630 = vtos %v629
      %v631 = vld [vmem:[#allocation2 + $0x6] sm:$0x1]
      %v632 = vstv %s616
      %v633 = vadd.f32 %v631, %v632
      %634 = vst [vmem:[#allocation2 + $0x6] sm:$0x1] %v633
      %v635 = vld [vmem:[#allocation2 + $0x7] sm:$0x1]
      %v636 = vstv %s630
      %v637 = vadd.f32 %v635, %v636
      %638 = vst [vmem:[#allocation2 + $0x7] sm:$0x1] %v637
    $region41: #{tpu_custom_call.1} parent=1 // pred_fallthru
      _
    // Predicated region
    $region42: #{tpu_custom_call.1} parent=1 // pred_check
      _
    $region43: #{tpu_custom_call.1} parent=1 // pred_check_branch
      %640 = sbr.rel (0) target = $region45
    $region44: #{tpu_custom_call.1} parent=1 // pred_region
      %s642 = ssub.s32 128, 128
      %643 = vsyncadd [#allocation3], %s642
      %s645 = sshll.u32 [#allocation2], 4
      %s646 = int_to_ptr.vmem [resolvable:$true] %s645
      %648 = dma.vmem_to_hbm [thread:$0]  %s646, 128, %s8, [#allocation3]
    $region45: #{tpu_custom_call.1} parent=1 // pred_fallthru
      _
    // Predicated region
    $region46: #{tpu_custom_call.1} parent=1 // pred_check
      _
    $region47: #{tpu_custom_call.1} parent=1 // pred_check_branch
      %650 = sbr.rel (0) target = $region49
    $region48: #{tpu_custom_call.1} parent=1 // pred_region
      %651 = dma.done [#allocation3], 128
    $region49: #{tpu_custom_call.1} parent=1 // pred_fallthru
      _
    %652 = vsyncpa [#allocation3], 1

</llo_original>
